<compile_context>
chip_gen: v7x
topology: tpu7x:2x2x1
jax: 0.10.0
libtpu: 0.0.40
codegen_flags: <defaults>
</compile_context>

<pallas_src>
import functools
import math

import jax
import jax.numpy as jnp
from jax.experimental import pallas as pl
from jax.experimental.pallas import tpu as pltpu


def _identity_kernel(x_ref, o_ref):
    # Pure pass-through tile copy (the reference forward has no hot path).
    o_ref[...] = x_ref[...]


def _sublane_multiple(dtype):
    """Minimum sublane multiple for the dtype: 8 (32-bit), 16 (16-bit), 32 (8-bit)."""
    itemsize = jnp.dtype(dtype).itemsize
    if itemsize >= 4:
        return 8
    if itemsize == 2:
        return 16
    return 32


def _lane_cap(dtype):
    """Lane-tile cap keeping each tile at <= ~2 MiB with row tile <= 512.

    f32/i32 -> 1024 lanes, bf16 -> 2048, int8/fp8 -> 4096 (constant tile bytes).
    """
    return (2 * 1024 * 1024) // (512 * jnp.dtype(dtype).itemsize)


def _tiles(R, L, dtype):
    """Pick (sub,128)-aligned tiles, <= ~2 MiB each, with >= 2 grid blocks when possible.

    R and L are already padded to multiples of (sub, 128) by the caller; 512 and
    the lane cap are multiples of sub / 128 respectively, so tiles stay aligned.
    """
    sub = _sublane_multiple(dtype)
    tr = min(R, 512)
    tl = min(L, _lane_cap(dtype))
    # Ensure >= 2 blocks on a "parallel" axis so v7x can shard across its 2 TCs.
    if pl.cdiv(R, tr) * pl.cdiv(L, tl) < 2:
        if R >= 2 * sub:                       # prefer splitting rows
            tr = max(sub, ((R // 2) // sub) * sub)
        elif L >= 2 * 128:                     # otherwise split lanes
            tl = max(128, ((L // 2) // 128) * 128)
    return tr, tl


def _flatten_lane_dense(x):
    """Flatten `x` to a lane-dense 2D slab (R % sub == 0, L % 128 == 0).

    Pads with zeros when needed.  Returns (x2d, reconstruct) where
    reconstruct(y2d) strips the padding and restores x's original shape.
    """
    shape = tuple(int(s) for s in x.shape)
    total = math.prod(shape) if shape else 1
    sub = _sublane_multiple(x.dtype)

    # Prefer a natural trailing-axes product that is a multiple of 128 (>=512 best).
    best = None
    suffix = 1
    for k in range(len(shape) - 1, 0, -1):
        suffix *= shape[k]
        if suffix % 128 == 0:
            best = suffix
            if suffix >= 512:
                break

    if best is not None:
        R0, L0 = total // best, best
        x2d = x.reshape(R0, L0)
        pad_r = (-R0) % sub
        if pad_r:
            x2d = jnp.pad(x2d, ((0, pad_r), (0, 0)))

        def reconstruct(y2d):
            return y2d[:R0, :].reshape(shape)

        return x2d, reconstruct

    # Fallback (no 128-multiple suffix): flatten to 1D, pad to k*sub*1024 and
    # reshape to (k*sub, 1024) — sublane-full rows and unmasked lane-dense stores
    # (never a (1, total) single-row / full-extent block).
    lw = 1024
    flat = x.reshape(-1)
    padded = pl.cdiv(max(total, 1), sub * lw) * (sub * lw)
    if padded != total:
        flat = jnp.pad(flat, (0, padded - total))
    x2d = flat.reshape(padded // lw, lw)

    def reconstruct(y2d):
        return y2d.reshape(-1)[:total].reshape(shape)

    return x2d, reconstruct


def _identity_copy_2d(x2d):
    """Tiled identity copy through VMEM via pallas_call (aligned, double-buffered)."""
    R, L = (int(d) for d in x2d.shape)
    tr, tl = _tiles(R, L, x2d.dtype)
    grid = (pl.cdiv(R, tr), pl.cdiv(L, tl))
    itemsize = jnp.dtype(x2d.dtype).itemsize
    return pl.pallas_call(
        _identity_kernel,
        out_shape=jax.ShapeDtypeStruct((R, L), x2d.dtype),
        grid=grid,
        in_specs=[pl.BlockSpec((tr, tl), lambda i, j: (i, j))],
        out_specs=pl.BlockSpec((tr, tl), lambda i, j: (i, j)),
        # Output reuses the input buffer; the input here is always an internal
        # intermediate (reshape/pad result inside the jit), never a donated
        # caller buffer, so no caller array is ever invalidated.
        input_output_aliases={0: 0},
        compiler_params=pltpu.CompilerParams(
            dimension_semantics=("parallel", "parallel"),
        ),
        cost_estimate=pl.CostEstimate(
            flops=0, transcendentals=0, bytes_accessed=2 * R * L * itemsize),
    )(x2d)


@jax.jit
def _roundtrip(x):
    """Bit-exact round trip of `x` through the tiled Pallas identity kernel."""
    x2d, reconstruct = _flatten_lane_dense(x)
    return reconstruct(_identity_copy_2d(x2d))


# Fixed-size pipeline probe: one 512x1024 f32 slab (2 MiB).  _tiles() splits it
# into a (2, 1) grid so both v7x TensorCores get a block; constant cost,
# independent of the user's tensors.
_PROBE_ROWS, _PROBE_LANES = 512, 1024


@functools.lru_cache(maxsize=1)
def _probe_input():
    return jnp.arange(_PROBE_ROWS * _PROBE_LANES, dtype=jnp.float32).reshape(
        _PROBE_ROWS, _PROBE_LANES)


def _run_pipeline_probe():
    """Constant-cost smoke test of the Pallas pipeline; never touches user buffers."""
    return _roundtrip(_probe_input())


class BaseModelPallas:
    """Pallas equivalent of BaseModel. No parameters (reference __init__ is `pass`)."""

    def __init__(self, debug_identity=False):
        # TODO(synk): reference __init__ is `pass` — no parameters to initialize.
        self._debug_identity = debug_identity

    def forward(self, inputs):
        # Reference forward is `pass` -> returns None (no computation).
        if self._debug_identity:
            # Debug-only: run the fixed 2 MiB probe (async dispatch, no host
            # sync, no donation/aliasing of the caller's arrays).
            _run_pipeline_probe()
        # TODO(synk): reference forward has no body; it returns None.
        return None


if __name__ == "__main__":
    key = jax.random.PRNGKey(0)
    k_img, k_txt = jax.random.split(key)
    # Small synthetic "image and text" inputs consistent with the docstring.
    image = jax.random.normal(k_img, (2, 4, 16, 16), dtype=jnp.float32)  # NCHW
    text = jax.random.randint(k_txt, (2, 8), 0, 1000, dtype=jnp.int32)   # [batch, seq]

    model = BaseModelPallas()
    out = model.forward({"image": image, "text": text})
    assert out is None  # matches PyTorch BaseModel.forward returning None

    # Exercise the Pallas identity kernel on several shapes/dtypes and verify
    # bit-exact round trips (natural lane-dense path, bf16 (16,128) tiling,
    # int32 + unaligned-shape padded fallbacks).
    test_arrays = [
        image,                                                   # (2,4,16,16) f32
        image.astype(jnp.bfloat16),                              # dtype-aware tiling
        text,                                                    # int32 pad fallback
        jax.random.normal(k_img, (3, 5, 7), dtype=jnp.float32),  # unaligned fallback
    ]
    for x in test_arrays:
        y = jax.block_until_ready(_roundtrip(x))
        assert y.shape == x.shape and y.dtype == x.dtype
        assert bool(jnp.array_equal(y, x))

    # Debug forward path (fixed probe, user buffers untouched and still valid).
    dbg_model = BaseModelPallas(debug_identity=True)
    assert dbg_model.forward({"image": image, "text": text}) is None
    probe_out = jax.block_until_ready(_run_pipeline_probe())
    assert bool(jnp.array_equal(probe_out, _probe_input()))
    assert bool(jnp.array_equal(image, image))  # caller buffer never donated

    print("KERNEL_OK")
</pallas_src>

<mosaic_0001>
module attributes {stable_mosaic.version = 11 : i64} {
  func.func @_identity_kernel(%arg0: i32, %arg1: i32, %arg2: memref<8x512xf32, #tpu.memory_space<vmem>>, %arg3: memref<8x512xf32, #tpu.memory_space<vmem>>) attributes {dimension_semantics = [#tpu.dimension_semantics<parallel>, #tpu.dimension_semantics<parallel>], iteration_bounds = array<i64: 1, 2>, scalar_prefetch = 0 : i64, scratch_operands = 0 : i64, tpu.core_type = #tpu.core_type<tc>, window_params = [{transform_indices = @transform_0, window_bounds = array<i64: 8, 512>}, {transform_indices = @transform_1, window_bounds = array<i64: 8, 512>}]} {
    %c0 = arith.constant 0 : index
    %c0_0 = arith.constant 0 : index
    %0 = vector.load %arg2[%c0, %c0_0] : memref<8x512xf32, #tpu.memory_space<vmem>>, vector<8x512xf32>
    %c0_1 = arith.constant 0 : index
    %c0_2 = arith.constant 0 : index
    %1 = vector.load %arg3[%c0_1, %c0_2] : memref<8x512xf32, #tpu.memory_space<vmem>>, vector<8x512xf32>
    tpu.vector_store %arg3[%c0_1, %c0_2], %0 {strides = array<i32>} : memref<8x512xf32, #tpu.memory_space<vmem>>, vector<8x512xf32>,
    return
  }
  func.func @transform_0(%arg0: i32, %arg1: i32) -> (i32, i32) {
    %c0_i32 = arith.constant 0 : i32
    return %arg0, %arg1 : i32, i32
  }
  func.func @transform_1(%arg0: i32, %arg1: i32) -> (i32, i32) {
    %c0_i32 = arith.constant 0 : i32
    return %arg0, %arg1 : i32, i32
  }
}

</mosaic_0001>

<llo_original>
// kernel: _roundtrip.1
$region0: #{_roundtrip.1}
  #allocation0 [shape = 'u32[]', space=smem, size = 0x4, offset = 0x4, fixed_abs, tag = 'smem constant byte address 0x4 - core index']
  #allocation1 [shape = 'u32[144,128]{1,0:T(1,128)}', space=vmem, size = 0x12000, scoped, tag = 'internal scratch']
  %s0 = inlined_call_operand.vmem [shape: f32[8,1024], index: 0, kind: input, shape index: {}, may-alias: {0,1}]
  %s1 = inlined_call_operand.vmem [shape: f32[8,1024], index: 1, kind: output, shape index: {}, may-alias: {0,1}]
  %s2 = sld [smem:[#allocation0]]
  $region37: #{_roundtrip.1} parent=0
    _
  %s4 = ssub.s32 1, %s2
  %s5 = scalar_select 0, %s4, %s2
  loop: start=0, step=1, limit=4
  $region2: #{_roundtrip.1} parent=0 // loop_pre_header
    _
  $region3: #{_roundtrip.1} parent=0 // loop_header
    %s7 = sphi 0, %s11
    %p8 = scmp.ge.s32.totalorder %s7, 4
    %s14 = sphi 0, %s26
    %s15 = sphi 0, %s22
    %s16 = sphi 0, %s14
    %s17 = sphi 0, %s15
    %s18 = sphi 0, %s16
    %s19 = sphi 0, %s17
    %s31 = sphi 0, %s33
    %s34 = sphi 0, %s31
    %s35 = sphi 0, %s34
    %s51 = sphi 0, %s35
    %s59 = sphi 0, %s61
    %s62 = sphi 0, %s59
    %s63 = sphi 0, %s62
    %s79 = sphi 0, %s63
  $region4: #{_roundtrip.1} parent=0 // loop_header_branch
    %10 = sbr.rel (%p8) target = $region8
  $region5: #{_roundtrip.1} parent=0 // loop_body
    %s12 = ssub.s32 %s7, 1
    %s13 = ssub.s32 %s7, 2
    %s20 = sadd.s32 1, %s15
    %p21 = scmp.ge.s32.totalorder %s20, 2
    %s22 = scalar_select %p21, 0, %s20
    %s23 = sadd.s32 1, %s14
    %s24 = scalar_select %p21, %s23, %s14
    %p25 = scmp.ge.s32.totalorder %s24, 1
    %s26 = scalar_select %p25, 0, %s24
    %s27 = ssub.s32 %s14, %s26
    %s28 = ssub.s32 %s15, %s22
    %s29 = sor.u32 %s27, %s28
    %p30 = scmp.eq.s32.totalorder %s29, 0
    %s32 = sadd.s32 %s31, 1
    %s33 = scalar_select %p30, %s31, %s32
    %p36 = pneg %p30
    %p37 = scmp.eq.s32.totalorder %s7, 1
    %p38 = por %p36, %p37
    %p39 = scmp.ne.s32.totalorder %s31, %s34
    %p40 = scmp.eq.s32.totalorder %s7, 0
    %p41 = por %p39, %p40
    %p42 = scmp.ne.s32.totalorder %s31, %s34
    %p43 = scmp.eq.s32.totalorder %s12, 1
    %p44 = por %p42, %p43
    %p45 = scmp.ne.s32.totalorder %s34, %s35
    %p46 = scmp.eq.s32.totalorder %s12, 0
    %p47 = por %p45, %p46
    %p48 = scmp.ne.s32.totalorder %s34, %s35
    %p49 = scmp.eq.s32.totalorder %s13, 1
    %p50 = por %p48, %p49
    %p52 = scmp.ne.s32.totalorder %s35, %s51
    %p53 = scmp.eq.s32.totalorder %s13, 0
    %p54 = por %p52, %p53
    %s55 = ssub.s32 %s14, %s26
    %s56 = ssub.s32 %s15, %s22
    %s57 = sor.u32 %s55, %s56
    %p58 = scmp.eq.s32.totalorder %s57, 0
    %s60 = sadd.s32 %s59, 1
    %s61 = scalar_select %p58, %s59, %s60
    %p64 = pneg %p58
    %p65 = scmp.eq.s32.totalorder %s7, 1
    %p66 = por %p64, %p65
    %p67 = scmp.ne.s32.totalorder %s59, %s62
    %p68 = scmp.eq.s32.totalorder %s7, 0
    %p69 = por %p67, %p68
    %p70 = scmp.ne.s32.totalorder %s59, %s62
    %p71 = scmp.eq.s32.totalorder %s12, 1
    %p72 = por %p70, %p71
    %p73 = scmp.ne.s32.totalorder %s62, %s63
    %p74 = scmp.eq.s32.totalorder %s12, 0
    %p75 = por %p73, %p74
    %p76 = scmp.ne.s32.totalorder %s62, %s63
    %p77 = scmp.eq.s32.totalorder %s13, 1
    %p78 = por %p76, %p77
    %p80 = scmp.ne.s32.totalorder %s63, %s79
    %p81 = scmp.eq.s32.totalorder %s13, 0
    %p82 = por %p80, %p81
    %p83 = scmp.le.s32.totalorder 1, %s7
    %p84 = scmp.lt.s32.totalorder %s7, 3
    %p85 = pnand %p83, %p84
    %p86 = pneg %p85
    // Predicated region
    $region9: #{_roundtrip.1} parent=5 // pred_check
      _
    $region10: #{_roundtrip.1} parent=5 // pred_check_branch
      %88 = sbr.rel (%p85) target = $region12
    $region11: #{_roundtrip.1} parent=5 // pred_region
      %s89 = ssub.s32 %s7, 1
    $region12: #{_roundtrip.1} parent=5 // pred_fallthru
      _
    %p90 = scmp.lt.s32.totalorder %s7, 2
    // Predicated region
    $region13: #{_roundtrip.1} parent=5 // pred_check
      %p91 = pneg %p90
    $region14: #{_roundtrip.1} parent=5 // pred_check_branch
      %93 = sbr.rel (%p91) target = $region16
    $region15: #{_roundtrip.1} parent=5 // pred_region
      // Predicated region
      $region17: #{_roundtrip.1} parent=15 // pred_check
        %p94 = pneg %p41
      $region18: #{_roundtrip.1} parent=15 // pred_check_branch
        %96 = sbr.rel (%p94) target = $region20
      $region19: #{_roundtrip.1} parent=15 // pred_region
        %s97 = smul.u32 4, %s15
        %p98 = scmp.lt.s32.totalorder %s14, 0
        %s99 = scalar_select %p98, %s14, 0
        %p100 = scmp.lt.s32.totalorder %s97, 7
        %s101 = scalar_select %p100, %s97, 7
        %s102 = smul.addr %s99, 8
        %s103 = sadd.s32 %s101, %s102
        %s104 = smul.addr %s103, 8
        %s105 = scalar_lea.vmem %s0, %s104
        %s106 = smul.u32 4, %s15
      $region20: #{_roundtrip.1} parent=15 // pred_fallthru
        _
    $region16: #{_roundtrip.1} parent=5 // pred_fallthru
      _
    %p107 = scmp.le.s32.totalorder 1, %s7
    %p108 = scmp.lt.s32.totalorder %s7, 3
    %p109 = pnand %p107, %p108
    %p110 = pneg %p109
    // Predicated region
    $region21: #{_roundtrip.1} parent=5 // pred_check
      _
    $region22: #{_roundtrip.1} parent=5 // pred_check_branch
      %112 = sbr.rel (%p109) target = $region24
    $region23: #{_roundtrip.1} parent=5 // pred_region
      %s113 = ssub.s32 %s7, 1
      %s114 = smul.u32 4, %s17
      %p115 = scmp.lt.s32.totalorder %s16, 0
      %s116 = scalar_select %p115, %s16, 0
      %p117 = scmp.lt.s32.totalorder %s114, 7
      %s118 = scalar_select %p117, %s114, 7
      %s119 = smul.addr %s116, 8
      %s120 = sadd.s32 %s118, %s119
      %s121 = smul.addr %s120, 8
      %s122 = scalar_lea.vmem %s0, %s121
      %p123 = pneg %p47
      %p124 = pneg %p44
      %p125 = pneg %p75
      %p126 = pneg %p72
      %s127 = smul.u32 4, %s17
      %p128 = scmp.lt.s32.totalorder %s16, 0
      %s129 = scalar_select %p128, %s16, 0
      %p130 = scmp.lt.s32.totalorder %s127, 7
      %s131 = scalar_select %p130, %s127, 7
      %s132 = smul.addr %s129, 8
      %s133 = sadd.s32 %s131, %s132
      %s134 = smul.addr %s133, 8
      %s135 = scalar_lea.vmem %s1, %s134
      %s136 = smul.u32 4, %s17
      %p137 = scmp.lt.s32.totalorder %s16, 0
      %s138 = scalar_select %p137, %s16, 0
      %p139 = scmp.lt.s32.totalorder %s136, 7
      %s140 = scalar_select %p139, %s136, 7
      %s141 = smul.addr %s138, 8
      %s142 = sadd.s32 %s140, %s141
      %s143 = smul.addr %s142, 8
      %s144 = scalar_lea.vmem %s0, %s143
      %s145 = smul.u32 4, %s17
      %s146 = smul.u32 4, %s17
      %p147 = scmp.lt.s32.totalorder %s16, 0
      %s148 = scalar_select %p147, %s16, 0
      %p149 = scmp.lt.s32.totalorder %s146, 7
      %s150 = scalar_select %p149, %s146, 7
      %s151 = smul.addr %s148, 8
      %s152 = sadd.s32 %s150, %s151
      %s153 = smul.addr %s152, 8
      %s154 = scalar_lea.vmem %s1, %s153
      %s155 = smul.u32 4, %s17
      %v156 = vld [vmem:[%s144] sm:$0xff]
      %v157 = vld [vmem:[%s144 + $0x8] sm:$0xff]
      %v158 = vld [vmem:[%s144 + $0x10] sm:$0xff]
      %v159 = vld [vmem:[%s144 + $0x18] sm:$0xff]
      %160 = vst [vmem:[%s154] sm:$0xff] %v156
      %161 = vst [vmem:[%s154 + $0x8] sm:$0xff] %v157
      %162 = vst [vmem:[%s154 + $0x10] sm:$0xff] %v158
      %163 = vst [vmem:[%s154 + $0x18] sm:$0xff] %v159
      %s164 = smul.u32 4, %s17
      %p165 = scmp.lt.s32.totalorder %s16, 0
      %s166 = scalar_select %p165, %s16, 0
      %p167 = scmp.lt.s32.totalorder %s164, 7
      %s168 = scalar_select %p167, %s164, 7
      %s169 = smul.addr %s166, 8
      %s170 = sadd.s32 %s168, %s169
      %s171 = smul.addr %s170, 8
      %s172 = scalar_lea.vmem %s1, %s171
      // Predicated region
      $region25: #{_roundtrip.1} parent=23 // pred_check
        %p173 = pneg %p72
      $region26: #{_roundtrip.1} parent=23 // pred_check_branch
        %175 = sbr.rel (%p173) target = $region28
      $region27: #{_roundtrip.1} parent=23 // pred_region
        %s176 = smul.u32 4, %s17
      $region28: #{_roundtrip.1} parent=23 // pred_fallthru
        _
    $region24: #{_roundtrip.1} parent=5 // pred_fallthru
      _
    %p177 = scmp.le.s32.totalorder 2, %s7
    // Predicated region
    $region29: #{_roundtrip.1} parent=5 // pred_check
      %p178 = pneg %p177
    $region30: #{_roundtrip.1} parent=5 // pred_check_branch
      %180 = sbr.rel (%p178) target = $region32
    $region31: #{_roundtrip.1} parent=5 // pred_region
      %s181 = ssub.s32 %s7, 2
      // Predicated region
      $region33: #{_roundtrip.1} parent=31 // pred_check
        %p182 = pneg %p78
      $region34: #{_roundtrip.1} parent=31 // pred_check_branch
        %184 = sbr.rel (%p182) target = $region36
      $region35: #{_roundtrip.1} parent=31 // pred_region
        %s185 = smul.u32 4, %s19
        %p186 = scmp.lt.s32.totalorder %s18, 0
        %s187 = scalar_select %p186, %s18, 0
        %p188 = scmp.lt.s32.totalorder %s185, 7
        %s189 = scalar_select %p188, %s185, 7
        %s190 = smul.addr %s187, 8
        %s191 = sadd.s32 %s189, %s190
        %s192 = smul.addr %s191, 8
        %s193 = scalar_lea.vmem %s1, %s192
      $region36: #{_roundtrip.1} parent=31 // pred_fallthru
        _
    $region32: #{_roundtrip.1} parent=5 // pred_fallthru
      _
  $region6: #{_roundtrip.1} parent=0 // loop_footer
    %s11 = sadd.s32 1, %s7
  $region7: #{_roundtrip.1} parent=0 // loop_footer_branch
    %6 = sbr.rel target = $region3
  $region8: #{_roundtrip.1} parent=0 // loop_exit
    _

</llo_original>
